<compile_context>
chip_gen: v5e
topology: v5e:2x2
jax: 0.10.0
libtpu: 0.0.40
codegen_flags: <defaults>
</compile_context>

<pallas_src>
import functools

import jax
import jax.numpy as jnp
from jax.experimental import pallas as pl
from jax.experimental.pallas import tpu as pltpu


def _round_up(x, m):
    return (x + m - 1) // m * m


# ---------------------------------------------------------------------------
# Conv-as-GEMM kernel:  y = relu(x @ w + b)
#   - bf16 MXU operands, f32 accumulate inside the dot
#   - K and N are single full-extent blocks (no padding, no K grid axis,
#     no accumulator scratch); grid streams over M only.
# ---------------------------------------------------------------------------
def _gemm_bias_relu_kernel(x_ref, w_ref, b_ref, o_ref):
    y = jnp.dot(x_ref[...], w_ref[...], preferred_element_type=jnp.float32)
    o_ref[...] = jnp.maximum(y + b_ref[...], 0.0).astype(o_ref.dtype)


def gemm_bias_relu(x, w, b, *, out_dtype=jnp.bfloat16, tm_max=1024,
                   min_m_tiles=2):
    """relu(x @ w + b) with full-K / full-N blocks and an M-only grid."""
    M, K = x.shape
    K2, N = w.shape
    assert K == K2

    # >= 2 M tiles when possible so "parallel" semantics can use both v7x TCs;
    # large tm otherwise to amortize per-grid-step overhead on v5e/v6e.
    tm = min(tm_max, _round_up(max(pl.cdiv(M, min_m_tiles), 8), 8))
    Mp = _round_up(M, tm)

    xp = x if Mp == M else jnp.pad(x, ((0, Mp - M), (0, 0)))
    xp = xp.astype(jnp.bfloat16)
    wb = w.astype(jnp.bfloat16)
    br = b.astype(jnp.float32).reshape(1, N)

    cost = pl.CostEstimate(
        flops=2 * Mp * N * K, transcendentals=0,
        bytes_accessed=int(Mp * K * 2 + K * N * 2 + N * 4
                           + Mp * N * jnp.dtype(out_dtype).itemsize))

    out = pl.pallas_call(
        _gemm_bias_relu_kernel,
        out_shape=jax.ShapeDtypeStruct((Mp, N), out_dtype),
        grid_spec=pltpu.PrefetchScalarGridSpec(
            num_scalar_prefetch=0,
            grid=(Mp // tm,),
            in_specs=[
                pl.BlockSpec((tm, K), lambda i: (i, 0)),   # full-K LHS stream
                pl.BlockSpec((K, N), lambda i: (0, 0)),    # resident weight
                pl.BlockSpec((1, N), lambda i: (0, 0)),    # resident bias
            ],
            out_specs=pl.BlockSpec((tm, N), lambda i: (i, 0))),
        compiler_params=pltpu.CompilerParams(
            dimension_semantics=("parallel",),
            vmem_limit_bytes=32 * 1024 * 1024),
        cost_estimate=cost,
    )(xp, wb, br)
    return out if Mp == M else out[:M]


# ---------------------------------------------------------------------------
# Fused conv2 + ReLU + spatial mean pool + [Linear,BN,ReLU] x2 + classifier
# in ONE pallas_call, grid over batch.  BN is pre-folded into (w, b); the
# (HW, enc_hid) map lives only in registers/VMEM and never touches HBM.
# ---------------------------------------------------------------------------
def _conv2_pool_head_kernel(p_ref, cw_ref, cb_ref, w1_ref, b1_ref,
                            w2_ref, b2_ref, w3_ref, b3_ref, o_ref, *, inv_hw):
    patches = p_ref[0]                                        # (HW, K2) bf16
    y = jnp.dot(patches, cw_ref[...], preferred_element_type=jnp.float32)
    y = jnp.maximum(y + cb_ref[...], 0.0)                     # conv2 + ReLU
    feats = jnp.sum(y, axis=0, keepdims=True) * inv_hw        # (1, C) mean pool
    h = jnp.dot(feats.astype(jnp.bfloat16), w1_ref[...],
                preferred_element_type=jnp.float32)
    h = jnp.maximum(h + b1_ref[...], 0.0)
    h = jnp.dot(h.astype(jnp.bfloat16), w2_ref[...],
                preferred_element_type=jnp.float32)
    h = jnp.maximum(h + b2_ref[...], 0.0)
    out = jnp.dot(h.astype(jnp.bfloat16), w3_ref[...],
                  preferred_element_type=jnp.float32)
    o_ref[0] = (out + b3_ref[...]).astype(o_ref.dtype)        # (1, Ncp)


def conv2_pool_head(p2, conv2_w, conv2_b, w1, b1, w2, b2, w3, b3):
    """p2: (B, H2*W2, 9*C1) bf16 patches -> (B, n_classes) f32 logits."""
    B, HW, K2 = p2.shape
    C = conv2_w.shape[1]
    Nm = w2.shape[1]
    Nc = w3.shape[1]
    Ncp = _round_up(Nc, 128)                  # lane-dense classifier output

    cwb = conv2_w.astype(jnp.bfloat16)
    cbr = conv2_b.astype(jnp.float32).reshape(1, C)
    w1b = w1.astype(jnp.bfloat16)
    b1r = b1.astype(jnp.float32).reshape(1, C)
    w2b = w2.astype(jnp.bfloat16)
    b2r = b2.astype(jnp.float32).reshape(1, Nm)
    w3b = jnp.pad(w3, ((0, 0), (0, Ncp - Nc))).astype(jnp.bfloat16)
    b3r = jnp.pad(b3, (0, Ncp - Nc)).astype(jnp.float32).reshape(1, Ncp)

    cost = pl.CostEstimate(
        flops=2 * B * (HW * K2 * C + C * C + C * Nm + Nm * Ncp),
        transcendentals=0,
        bytes_accessed=int(B * HW * K2 * 2 + K2 * C * 2
                           + (C * C + C * Nm + Nm * Ncp) * 2
                           + (C + C + Nm + Ncp) * 4 + B * Ncp * 4))

    out = pl.pallas_call(
        functools.partial(_conv2_pool_head_kernel, inv_hw=1.0 / float(HW)),
        out_shape=jax.ShapeDtypeStruct((B, 1, Ncp), jnp.float32),
        grid_spec=pltpu.PrefetchScalarGridSpec(
            num_scalar_prefetch=0,
            grid=(B,),
            in_specs=[
                pl.BlockSpec((1, HW, K2), lambda b: (b, 0, 0)),  # per-batch patches
                pl.BlockSpec((K2, C), lambda b: (0, 0)),
                pl.BlockSpec((1, C), lambda b: (0, 0)),
                pl.BlockSpec((C, C), lambda b: (0, 0)),
                pl.BlockSpec((1, C), lambda b: (0, 0)),
                pl.BlockSpec((C, Nm), lambda b: (0, 0)),
                pl.BlockSpec((1, Nm), lambda b: (0, 0)),
                pl.BlockSpec((Nm, Ncp), lambda b: (0, 0)),
                pl.BlockSpec((1, Ncp), lambda b: (0, 0)),
            ],
            out_specs=pl.BlockSpec((1, 1, Ncp), lambda b: (b, 0, 0))),
        compiler_params=pltpu.CompilerParams(
            dimension_semantics=("parallel",),
            vmem_limit_bytes=32 * 1024 * 1024),
        cost_estimate=cost,
    )(p2, cwb, cbr, w1b, b1r, w2b, b2r, w3b, b3r)
    return out[:, 0, :Nc]                      # single tiny slice at the end


# ---------------------------------------------------------------------------
# Plain-JAX glue: im2col patch extraction (reshape/slice only, no math).
# TODO(synk): replace with in-kernel tap gathering (see header note).
# ---------------------------------------------------------------------------
def im2col(x_nhwc, k, stride, pad):
    """x: (B, H, W, C) -> patches (B*Ho*Wo, k*k*C), Ho, Wo (keeps input dtype)."""
    B, H, W, C = x_nhwc.shape
    xp = jnp.pad(x_nhwc, ((0, 0), (pad, pad), (pad, pad), (0, 0)))
    Ho = (H + 2 * pad - k) // stride + 1
    Wo = (W + 2 * pad - k) // stride + 1
    cols = []
    for dy in range(k):
        for dx in range(k):
            cols.append(xp[:, dy:dy + stride * Ho:stride,
                           dx:dx + stride * Wo:stride, :])
    patches = jnp.stack(cols, axis=-2)            # (B, Ho, Wo, k*k, C)
    return patches.reshape(B * Ho * Wo, k * k * C), Ho, Wo


def fold_batchnorm(w, b, gamma, beta, mean, var, eps=1e-5):
    """Fold eval-mode BatchNorm1d into the preceding Linear (w, b)."""
    s = gamma / jnp.sqrt(var + eps)
    return w * s[None, :], (b - mean) * s + beta


# ---------------------------------------------------------------------------
# Model: deterministic parameter init + forward
# ---------------------------------------------------------------------------
def init_params(key, *, in_channels, c1, enc_hid_dim, mlp_encoding_size, k=3):
    ks = jax.random.split(key, 10)
    ones = lambda n: jnp.ones((n,), jnp.float32)
    zeros = lambda n: jnp.zeros((n,), jnp.float32)
    p = {
        # conv weights stored as (kH*kW*Cin, Cout), matching im2col tap order
        "conv1_w": jax.random.normal(ks[0], (k * k * in_channels, c1), jnp.float32) * 0.1,
        "conv1_b": jax.random.normal(ks[1], (c1,), jnp.float32) * 0.01,
        "conv2_w": jax.random.normal(ks[2], (k * k * c1, enc_hid_dim), jnp.float32) * 0.1,
        "conv2_b": jax.random.normal(ks[3], (enc_hid_dim,), jnp.float32) * 0.01,
        # head (depth=1): Linear+BN+ReLU, Linear+BN+ReLU, classifier Linear -> 2
        "fc1_w": jax.random.normal(ks[4], (enc_hid_dim, enc_hid_dim), jnp.float32) * 0.1,
        "fc1_b": jax.random.normal(ks[5], (enc_hid_dim,), jnp.float32) * 0.01,
        "bn1_gamma": ones(enc_hid_dim), "bn1_beta": zeros(enc_hid_dim),
        "bn1_mean": zeros(enc_hid_dim), "bn1_var": ones(enc_hid_dim),
        "fc2_w": jax.random.normal(ks[6], (enc_hid_dim, mlp_encoding_size), jnp.float32) * 0.1,
        "fc2_b": jax.random.normal(ks[7], (mlp_encoding_size,), jnp.float32) * 0.01,
        "bn2_gamma": ones(mlp_encoding_size), "bn2_beta": zeros(mlp_encoding_size),
        "bn2_mean": zeros(mlp_encoding_size), "bn2_var": ones(mlp_encoding_size),
        "fc3_w": jax.random.normal(ks[8], (mlp_encoding_size, 2), jnp.float32) * 0.1,
        "fc3_b": jax.random.normal(ks[9], (2,), jnp.float32) * 0.01,
    }
    return p


def encoder_classifier_2d_forward(x, params):
    """x: (B, T, 1, W, H) float32  ->  (B*T', 2) with T' = 1  =>  (B, 2)."""
    B, T, ONE, W, H = x.shape
    assert ONE == 1, f"input shape: {x.shape}"
    assert H == W, f"input shape: {x.shape}"

    # From3D: fold the size-1 time dim into batch; T acts as colour channels.
    x2d = x[:, :, 0, :, :]                            # (B, T, W, H) == NCHW, C=T
    x_nhwc = jnp.transpose(x2d, (0, 2, 3, 1)).astype(jnp.bfloat16)   # NHWC

    # --- encoder conv1 (3x3, s2, pad1) + ReLU: single-K-tile Pallas GEMM,
    #     bf16 output flows straight into conv2's patch extraction.
    p1, H1, W1 = im2col(x_nhwc, k=3, stride=2, pad=1)
    c1 = params["conv1_w"].shape[1]
    y1 = gemm_bias_relu(p1, params["conv1_w"], params["conv1_b"],
                        out_dtype=jnp.bfloat16)
    y1 = y1.reshape(B, H1, W1, c1)                    # free relabel, no copy slice

    # --- conv2 patches (bf16) feed the fully fused conv2+pool+head kernel.
    p2, H2, W2 = im2col(y1, k=3, stride=2, pad=1)
    p2 = p2.reshape(B, H2 * W2, p2.shape[-1])

    # --- fold eval-mode BN (running mean/var + affine) into the head Linears
    w1, b1 = fold_batchnorm(params["fc1_w"], params["fc1_b"],
                            params["bn1_gamma"], params["bn1_beta"],
                            params["bn1_mean"], params["bn1_var"])
    w2, b2 = fold_batchnorm(params["fc2_w"], params["fc2_b"],
                            params["bn2_gamma"], params["bn2_beta"],
                            params["bn2_mean"], params["bn2_var"])

    # --- conv2 + ReLU + mean pool + selfsim_fc head, all in one kernel.
    # feats.transpose(-1,-2).reshape(-1, enc_hid_dim) is identity here (T'=1).
    out = conv2_pool_head(p2, params["conv2_w"], params["conv2_b"],
                          w1, b1, w2, b2, params["fc3_w"], params["fc3_b"])
    return out                                        # (B, 2)


if __name__ == "__main__":
    # Small shapes consistent with the module: batch=2, T(=channels)=4,
    # time dim = 1, img_size = 16, enc_hid_dim = 32, mlp_encoding_size = 16.
    B, T, W = 2, 4, 16
    key = jax.random.PRNGKey(0)
    k_x, k_p = jax.random.split(key)

    x = jax.random.normal(k_x, (B, T, 1, W, W), jnp.float32)
    params = init_params(k_p, in_channels=T, c1=16,
                         enc_hid_dim=32, mlp_encoding_size=16)

    fwd = jax.jit(encoder_classifier_2d_forward)
    out = jax.block_until_ready(fwd(x, params))
    assert out.shape == (B, 2), out.shape
    assert bool(jnp.all(jnp.isfinite(out)))
    print("KERNEL_OK")
</pallas_src>

<mosaic_0001>
module attributes {stable_mosaic.version = 11 : i64} {
  func.func @_gemm_bias_relu_kernel(%arg0: i32, %arg1: memref<64x36xbf16, #tpu.memory_space<vmem>>, %arg2: memref<36x16xbf16, #tpu.memory_space<vmem>>, %arg3: memref<1x16xf32, #tpu.memory_space<vmem>>, %arg4: memref<64x16xbf16, #tpu.memory_space<vmem>>) attributes {dimension_semantics = [#tpu.dimension_semantics<parallel>], iteration_bounds = array<i64: 2>, scalar_prefetch = 0 : i64, scratch_operands = 0 : i64, tpu.core_type = #tpu.core_type<tc>, window_params = [{transform_indices = @transform_0, window_bounds = array<i64: 64, 36>}, {pipeline_mode = #tpu.pipeline_mode<synchronous>, transform_indices = @transform_1, window_bounds = array<i64: 36, 16>}, {pipeline_mode = #tpu.pipeline_mode<synchronous>, transform_indices = @transform_2, window_bounds = array<i64: 1, 16>}, {transform_indices = @transform_3, window_bounds = array<i64: 64, 16>}]} {
    %c0 = arith.constant 0 : index
    %c0_0 = arith.constant 0 : index
    %0 = vector.load %arg1[%c0, %c0_0] : memref<64x36xbf16, #tpu.memory_space<vmem>>, vector<64x36xbf16>
    %c0_1 = arith.constant 0 : index
    %c0_2 = arith.constant 0 : index
    %1 = vector.load %arg2[%c0_1, %c0_2] : memref<36x16xbf16, #tpu.memory_space<vmem>>, vector<36x16xbf16>
    %cst = arith.constant dense<0.000000e+00> : vector<64x16xf32>
    %2 = tpu.matmul %0, %1, %cst {dimension_numbers = #tpu.dot_dimension_numbers<[1], [0], [0], [1], [0, 0, 1, 1], [], []>} : vector<64x36xbf16>, vector<36x16xbf16>, vector<64x16xf32> -> vector<64x16xf32>
    %c0_3 = arith.constant 0 : index
    %c0_4 = arith.constant 0 : index
    %3 = vector.load %arg3[%c0_3, %c0_4] : memref<1x16xf32, #tpu.memory_space<vmem>>, vector<1x16xf32>
    %4 = vector.broadcast %3 : vector<1x16xf32> to vector<64x16xf32>
    %5 = arith.addf %2, %4 : vector<64x16xf32>
    %cst_5 = arith.constant 0.000000e+00 : f32
    %6 = vector.broadcast %cst_5 : f32 to vector<64x16xf32>
    %7 = arith.maximumf %5, %6 : vector<64x16xf32>
    %8 = arith.truncf %7 : vector<64x16xf32> to vector<64x16xbf16>
    %c0_6 = arith.constant 0 : index
    %c0_7 = arith.constant 0 : index
    %9 = vector.load %arg4[%c0_6, %c0_7] : memref<64x16xbf16, #tpu.memory_space<vmem>>, vector<64x16xbf16>
    tpu.vector_store %arg4[%c0_6, %c0_7], %8 {strides = array<i32>} : memref<64x16xbf16, #tpu.memory_space<vmem>>, vector<64x16xbf16>,
    return
  }
  func.func @transform_0(%arg0: i32) -> (i32, i32) {
    %c0_i32 = arith.constant 0 : i32
    %c0_i32_0 = arith.constant 0 : i32
    return %arg0, %c0_i32 : i32, i32
  }
  func.func @transform_1(%arg0: i32) -> (i32, i32) {
    %c0_i32 = arith.constant 0 : i32
    %c0_i32_0 = arith.constant 0 : i32
    %c0_i32_1 = arith.constant 0 : i32
    return %c0_i32, %c0_i32_0 : i32, i32
  }
  func.func @transform_2(%arg0: i32) -> (i32, i32) {
    %c0_i32 = arith.constant 0 : i32
    %c0_i32_0 = arith.constant 0 : i32
    %c0_i32_1 = arith.constant 0 : i32
    return %c0_i32, %c0_i32_0 : i32, i32
  }
  func.func @transform_3(%arg0: i32) -> (i32, i32) {
    %c0_i32 = arith.constant 0 : i32
    %c0_i32_0 = arith.constant 0 : i32
    return %arg0, %c0_i32 : i32, i32
  }
}

module attributes {stable_mosaic.version = 11 : i64} {
  func.func @_conv2_pool_head_kernel(%arg0: i32, %arg1: memref<1x16x144xbf16, #tpu.memory_space<vmem>>, %arg2: memref<144x32xbf16, #tpu.memory_space<vmem>>, %arg3: memref<1x32xf32, #tpu.memory_space<vmem>>, %arg4: memref<32x32xbf16, #tpu.memory_space<vmem>>, %arg5: memref<1x32xf32, #tpu.memory_space<vmem>>, %arg6: memref<32x16xbf16, #tpu.memory_space<vmem>>, %arg7: memref<1x16xf32, #tpu.memory_space<vmem>>, %arg8: memref<16x128xbf16, #tpu.memory_space<vmem>>, %arg9: memref<1x128xf32, #tpu.memory_space<vmem>>, %arg10: memref<1x1x128xf32, #tpu.memory_space<vmem>>) attributes {dimension_semantics = [#tpu.dimension_semantics<parallel>], iteration_bounds = array<i64: 2>, scalar_prefetch = 0 : i64, scratch_operands = 0 : i64, tpu.core_type = #tpu.core_type<tc>, window_params = [{transform_indices = @transform_0, window_bounds = array<i64: 1, 16, 144>}, {pipeline_mode = #tpu.pipeline_mode<synchronous>, transform_indices = @transform_1, window_bounds = array<i64: 144, 32>}, {pipeline_mode = #tpu.pipeline_mode<synchronous>, transform_indices = @transform_2, window_bounds = array<i64: 1, 32>}, {pipeline_mode = #tpu.pipeline_mode<synchronous>, transform_indices = @transform_3, window_bounds = array<i64: 32, 32>}, {pipeline_mode = #tpu.pipeline_mode<synchronous>, transform_indices = @transform_4, window_bounds = array<i64: 1, 32>}, {pipeline_mode = #tpu.pipeline_mode<synchronous>, transform_indices = @transform_5, window_bounds = array<i64: 32, 16>}, {pipeline_mode = #tpu.pipeline_mode<synchronous>, transform_indices = @transform_6, window_bounds = array<i64: 1, 16>}, {pipeline_mode = #tpu.pipeline_mode<synchronous>, transform_indices = @transform_7, window_bounds = array<i64: 16, 128>}, {pipeline_mode = #tpu.pipeline_mode<synchronous>, transform_indices = @transform_8, window_bounds = array<i64: 1, 128>}, {transform_indices = @transform_9, window_bounds = array<i64: 1, 1, 128>}]} {
    %c0 = arith.constant 0 : index
    %c0_0 = arith.constant 0 : index
    %c0_1 = arith.constant 0 : index
    %0 = vector.load %arg1[%c0, %c0_0, %c0_1] : memref<1x16x144xbf16, #tpu.memory_space<vmem>>, vector<1x16x144xbf16>
    %1 = vector.shape_cast %0 : vector<1x16x144xbf16> to vector<16x144xbf16>
    %c0_2 = arith.constant 0 : index
    %c0_3 = arith.constant 0 : index
    %2 = vector.load %arg2[%c0_2, %c0_3] : memref<144x32xbf16, #tpu.memory_space<vmem>>, vector<144x32xbf16>
    %cst = arith.constant dense<0.000000e+00> : vector<16x32xf32>
    %3 = tpu.matmul %1, %2, %cst {dimension_numbers = #tpu.dot_dimension_numbers<[1], [0], [0], [1], [0, 0, 1, 1], [], []>} : vector<16x144xbf16>, vector<144x32xbf16>, vector<16x32xf32> -> vector<16x32xf32>
    %c0_4 = arith.constant 0 : index
    %c0_5 = arith.constant 0 : index
    %4 = vector.load %arg3[%c0_4, %c0_5] : memref<1x32xf32, #tpu.memory_space<vmem>>, vector<1x32xf32>
    %5 = vector.broadcast %4 : vector<1x32xf32> to vector<16x32xf32>
    %6 = arith.addf %3, %5 : vector<16x32xf32>
    %cst_6 = arith.constant 0.000000e+00 : f32
    %7 = vector.broadcast %cst_6 : f32 to vector<16x32xf32>
    %8 = arith.maximumf %6, %7 : vector<16x32xf32>
    %cst_7 = arith.constant dense<0.000000e+00> : vector<32xf32>
    %9 = vector.multi_reduction <add>, %8, %cst_7 [0] : vector<16x32xf32> to vector<32xf32>
    %10 = vector.shape_cast %9 : vector<32xf32> to vector<1x32xf32>
    %cst_8 = arith.constant 6.250000e-02 : f32
    %11 = vector.broadcast %cst_8 : f32 to vector<1x32xf32>
    %12 = arith.mulf %10, %11 : vector<1x32xf32>
    %13 = arith.truncf %12 : vector<1x32xf32> to vector<1x32xbf16>
    %c0_9 = arith.constant 0 : index
    %c0_10 = arith.constant 0 : index
    %14 = vector.load %arg4[%c0_9, %c0_10] : memref<32x32xbf16, #tpu.memory_space<vmem>>, vector<32x32xbf16>
    %cst_11 = arith.constant dense<0.000000e+00> : vector<1x32xf32>
    %15 = tpu.matmul %13, %14, %cst_11 {dimension_numbers = #tpu.dot_dimension_numbers<[1], [0], [0], [1], [0, 0, 1, 1], [], []>} : vector<1x32xbf16>, vector<32x32xbf16>, vector<1x32xf32> -> vector<1x32xf32>
    %c0_12 = arith.constant 0 : index
    %c0_13 = arith.constant 0 : index
    %16 = vector.load %arg5[%c0_12, %c0_13] : memref<1x32xf32, #tpu.memory_space<vmem>>, vector<1x32xf32>
    %17 = arith.addf %15, %16 : vector<1x32xf32>
    %cst_14 = arith.constant 0.000000e+00 : f32
    %18 = vector.broadcast %cst_14 : f32 to vector<1x32xf32>
    %19 = arith.maximumf %17, %18 : vector<1x32xf32>
    %20 = arith.truncf %19 : vector<1x32xf32> to vector<1x32xbf16>
    %c0_15 = arith.constant 0 : index
    %c0_16 = arith.constant 0 : index
    %21 = vector.load %arg6[%c0_15, %c0_16] : memref<32x16xbf16, #tpu.memory_space<vmem>>, vector<32x16xbf16>
    %cst_17 = arith.constant dense<0.000000e+00> : vector<1x16xf32>
    %22 = tpu.matmul %20, %21, %cst_17 {dimension_numbers = #tpu.dot_dimension_numbers<[1], [0], [0], [1], [0, 0, 1, 1], [], []>} : vector<1x32xbf16>, vector<32x16xbf16>, vector<1x16xf32> -> vector<1x16xf32>
    %c0_18 = arith.constant 0 : index
    %c0_19 = arith.constant 0 : index
    %23 = vector.load %arg7[%c0_18, %c0_19] : memref<1x16xf32, #tpu.memory_space<vmem>>, vector<1x16xf32>
    %24 = arith.addf %22, %23 : vector<1x16xf32>
    %cst_20 = arith.constant 0.000000e+00 : f32
    %25 = vector.broadcast %cst_20 : f32 to vector<1x16xf32>
    %26 = arith.maximumf %24, %25 : vector<1x16xf32>
    %27 = arith.truncf %26 : vector<1x16xf32> to vector<1x16xbf16>
    %c0_21 = arith.constant 0 : index
    %c0_22 = arith.constant 0 : index
    %28 = vector.load %arg8[%c0_21, %c0_22] : memref<16x128xbf16, #tpu.memory_space<vmem>>, vector<16x128xbf16>
    %cst_23 = arith.constant dense<0.000000e+00> : vector<1x128xf32>
    %29 = tpu.matmul %27, %28, %cst_23 {dimension_numbers = #tpu.dot_dimension_numbers<[1], [0], [0], [1], [0, 0, 1, 1], [], []>} : vector<1x16xbf16>, vector<16x128xbf16>, vector<1x128xf32> -> vector<1x128xf32>
    %c0_24 = arith.constant 0 : index
    %c0_25 = arith.constant 0 : index
    %30 = vector.load %arg9[%c0_24, %c0_25] : memref<1x128xf32, #tpu.memory_space<vmem>>, vector<1x128xf32>
    %31 = arith.addf %29, %30 : vector<1x128xf32>
    %c0_26 = arith.constant 0 : index
    %c0_27 = arith.constant 0 : index
    %c0_28 = arith.constant 0 : index
    %32 = vector.load %arg10[%c0_26, %c0_27, %c0_28] : memref<1x1x128xf32, #tpu.memory_space<vmem>>, vector<1x1x128xf32>
    %33 = vector.shape_cast %32 : vector<1x1x128xf32> to vector<1x128xf32>
    %34 = vector.shape_cast %31 : vector<1x128xf32> to vector<1x1x128xf32>
    tpu.vector_store %arg10[%c0_26, %c0_27, %c0_28], %34 {strides = array<i32>} : memref<1x1x128xf32, #tpu.memory_space<vmem>>, vector<1x1x128xf32>,
    return
  }
  func.func @transform_0(%arg0: i32) -> (i32, i32, i32) {
    %c0_i32 = arith.constant 0 : i32
    %c0_i32_0 = arith.constant 0 : i32
    %c0_i32_1 = arith.constant 0 : i32
    return %arg0, %c0_i32, %c0_i32_0 : i32, i32, i32
  }
  func.func @transform_1(%arg0: i32) -> (i32, i32) {
    %c0_i32 = arith.constant 0 : i32
    %c0_i32_0 = arith.constant 0 : i32
    %c0_i32_1 = arith.constant 0 : i32
    return %c0_i32, %c0_i32_0 : i32, i32
  }
  func.func @transform_2(%arg0: i32) -> (i32, i32) {
    %c0_i32 = arith.constant 0 : i32
    %c0_i32_0 = arith.constant 0 : i32
    %c0_i32_1 = arith.constant 0 : i32
    return %c0_i32, %c0_i32_0 : i32, i32
  }
  func.func @transform_3(%arg0: i32) -> (i32, i32) {
    %c0_i32 = arith.constant 0 : i32
    %c0_i32_0 = arith.constant 0 : i32
    %c0_i32_1 = arith.constant 0 : i32
    return %c0_i32, %c0_i32_0 : i32, i32
  }
  func.func @transform_4(%arg0: i32) -> (i32, i32) {
    %c0_i32 = arith.constant 0 : i32
    %c0_i32_0 = arith.constant 0 : i32
    %c0_i32_1 = arith.constant 0 : i32
    return %c0_i32, %c0_i32_0 : i32, i32
  }
  func.func @transform_5(%arg0: i32) -> (i32, i32) {
    %c0_i32 = arith.constant 0 : i32
    %c0_i32_0 = arith.constant 0 : i32
    %c0_i32_1 = arith.constant 0 : i32
    return %c0_i32, %c0_i32_0 : i32, i32
  }
  func.func @transform_6(%arg0: i32) -> (i32, i32) {
    %c0_i32 = arith.constant 0 : i32
    %c0_i32_0 = arith.constant 0 : i32
    %c0_i32_1 = arith.constant 0 : i32
    return %c0_i32, %c0_i32_0 : i32, i32
  }
  func.func @transform_7(%arg0: i32) -> (i32, i32) {
    %c0_i32 = arith.constant 0 : i32
    %c0_i32_0 = arith.constant 0 : i32
    %c0_i32_1 = arith.constant 0 : i32
    return %c0_i32, %c0_i32_0 : i32, i32
  }
  func.func @transform_8(%arg0: i32) -> (i32, i32) {
    %c0_i32 = arith.constant 0 : i32
    %c0_i32_0 = arith.constant 0 : i32
    %c0_i32_1 = arith.constant 0 : i32
    return %c0_i32, %c0_i32_0 : i32, i32
  }
  func.func @transform_9(%arg0: i32) -> (i32, i32, i32) {
    %c0_i32 = arith.constant 0 : i32
    %c0_i32_0 = arith.constant 0 : i32
    %c0_i32_1 = arith.constant 0 : i32
    return %arg0, %c0_i32, %c0_i32_0 : i32, i32, i32
  }
}

</mosaic_0001>

<llo_original>
// kernel: encoder_classifier_2d_forward.2
$region0: #{encoder_classifier_2d_forward.2}
  #allocation0 [shape = 'u32[]', space=smem, size = 0x4, offset = 0x4, fixed_abs, tag = 'smem constant byte address 0x4 - core index']
  #allocation1 [shape = 'u32[72,128]{1,0:T(1,128)}', space=vmem, size = 0x9000, scoped, tag = 'internal scratch']
  %s0 = inlined_call_operand.vmem [shape: bf16[128,36], index: 0, kind: input, shape index: {}]
  %s1 = inlined_call_operand.vmem [shape: bf16[36,16], index: 1, kind: input, shape index: {}]
  %s2 = inlined_call_operand.vmem [shape: f32[1,16], index: 2, kind: input, shape index: {}]
  %s3 = inlined_call_operand.vmem [shape: bf16[128,16], index: 3, kind: output, shape index: {}]
  %s4 = sld [smem:[#allocation0]]
  $region45: #{encoder_classifier_2d_forward.2} parent=0
    _
  %s6 = ssub.s32 1, %s4
  %s7 = scalar_select 0, %s6, %s4
  loop: start=0, step=1, limit=4
  $region2: #{encoder_classifier_2d_forward.2} parent=0 // loop_pre_header
    _
  $region3: #{encoder_classifier_2d_forward.2} parent=0 // loop_header
    %s9 = sphi 0, %s13
    %p10 = scmp.ge.s32.totalorder %s9, 4
    %s19 = sphi 0, %s21
    %s22 = sphi 0, %s19
    %s23 = sphi 0, %s22
    %s39 = sphi 0, %s23
    %s43 = sphi 0, %s43
    %s45 = sphi 0, %s43
    %s46 = sphi 0, %s45
    %s60 = sphi 0, %s46
    %s64 = sphi 0, %s64
    %s66 = sphi 0, %s64
    %s67 = sphi 0, %s66
    %s81 = sphi 0, %s67
    %s87 = sphi 0, %s89
    %s90 = sphi 0, %s87
    %s91 = sphi 0, %s90
    %s107 = sphi 0, %s91
  $region4: #{encoder_classifier_2d_forward.2} parent=0 // loop_header_branch
    %12 = sbr.rel (%p10) target = $region8
  $region5: #{encoder_classifier_2d_forward.2} parent=0 // loop_body
    %s14 = ssub.s32 %s9, 1
    %s15 = ssub.s32 %s9, 2
    %s16 = sadd.s32 %s9, 1
    %s17 = ssub.s32 %s9, %s16
    %p18 = scmp.eq.s32.totalorder %s17, 0
    %s20 = sadd.s32 %s19, 1
    %s21 = scalar_select %p18, %s19, %s20
    %p24 = pneg %p18
    %p25 = scmp.eq.s32.totalorder %s9, 1
    %p26 = por %p24, %p25
    %p27 = scmp.ne.s32.totalorder %s19, %s22
    %p28 = scmp.eq.s32.totalorder %s9, 0
    %p29 = por %p27, %p28
    %p30 = scmp.ne.s32.totalorder %s19, %s22
    %p31 = scmp.eq.s32.totalorder %s14, 1
    %p32 = por %p30, %p31
    %p33 = scmp.ne.s32.totalorder %s22, %s23
    %p34 = scmp.eq.s32.totalorder %s14, 0
    %p35 = por %p33, %p34
    %p36 = scmp.ne.s32.totalorder %s22, %s23
    %p37 = scmp.eq.s32.totalorder %s15, 1
    %p38 = por %p36, %p37
    %p40 = scmp.ne.s32.totalorder %s23, %s39
    %p41 = scmp.eq.s32.totalorder %s15, 0
    %p42 = por %p40, %p41
    %s44 = sadd.s32 %s43, 1
    %p47 = scmp.eq.s32.totalorder %s9, 1
    %p48 = scmp.ne.s32.totalorder %s43, %s45
    %p49 = scmp.eq.s32.totalorder %s9, 0
    %p50 = por %p48, %p49
    %p51 = scmp.ne.s32.totalorder %s43, %s45
    %p52 = scmp.eq.s32.totalorder %s14, 1
    %p53 = por %p51, %p52
    %p54 = scmp.ne.s32.totalorder %s45, %s46
    %p55 = scmp.eq.s32.totalorder %s14, 0
    %p56 = por %p54, %p55
    %p57 = scmp.ne.s32.totalorder %s45, %s46
    %p58 = scmp.eq.s32.totalorder %s15, 1
    %p59 = por %p57, %p58
    %p61 = scmp.ne.s32.totalorder %s46, %s60
    %p62 = scmp.eq.s32.totalorder %s15, 0
    %p63 = por %p61, %p62
    %s65 = sadd.s32 %s64, 1
    %p68 = scmp.eq.s32.totalorder %s9, 1
    %p69 = scmp.ne.s32.totalorder %s64, %s66
    %p70 = scmp.eq.s32.totalorder %s9, 0
    %p71 = por %p69, %p70
    %p72 = scmp.ne.s32.totalorder %s64, %s66
    %p73 = scmp.eq.s32.totalorder %s14, 1
    %p74 = por %p72, %p73
    %p75 = scmp.ne.s32.totalorder %s66, %s67
    %p76 = scmp.eq.s32.totalorder %s14, 0
    %p77 = por %p75, %p76
    %p78 = scmp.ne.s32.totalorder %s66, %s67
    %p79 = scmp.eq.s32.totalorder %s15, 1
    %p80 = por %p78, %p79
    %p82 = scmp.ne.s32.totalorder %s67, %s81
    %p83 = scmp.eq.s32.totalorder %s15, 0
    %p84 = por %p82, %p83
    %s85 = ssub.s32 %s9, %s16
    %p86 = scmp.eq.s32.totalorder %s85, 0
    %s88 = sadd.s32 %s87, 1
    %s89 = scalar_select %p86, %s87, %s88
    %p92 = pneg %p86
    %p93 = scmp.eq.s32.totalorder %s9, 1
    %p94 = por %p92, %p93
    %p95 = scmp.ne.s32.totalorder %s87, %s90
    %p96 = scmp.eq.s32.totalorder %s9, 0
    %p97 = por %p95, %p96
    %p98 = scmp.ne.s32.totalorder %s87, %s90
    %p99 = scmp.eq.s32.totalorder %s14, 1
    %p100 = por %p98, %p99
    %p101 = scmp.ne.s32.totalorder %s90, %s91
    %p102 = scmp.eq.s32.totalorder %s14, 0
    %p103 = por %p101, %p102
    %p104 = scmp.ne.s32.totalorder %s90, %s91
    %p105 = scmp.eq.s32.totalorder %s15, 1
    %p106 = por %p104, %p105
    %p108 = scmp.ne.s32.totalorder %s91, %s107
    %p109 = scmp.eq.s32.totalorder %s15, 0
    %p110 = por %p108, %p109
    %p111 = scmp.le.s32.totalorder 1, %s9
    %p112 = scmp.lt.s32.totalorder %s9, 3
    %p113 = pnand %p111, %p112
    %p114 = pneg %p113
    // Predicated region
    $region9: #{encoder_classifier_2d_forward.2} parent=5 // pred_check
      _
    $region10: #{encoder_classifier_2d_forward.2} parent=5 // pred_check_branch
      %116 = sbr.rel (%p113) target = $region12
    $region11: #{encoder_classifier_2d_forward.2} parent=5 // pred_region
      %s117 = ssub.s32 %s9, 1
      // Predicated region
      $region13: #{encoder_classifier_2d_forward.2} parent=11 // pred_check
        %p118 = pneg %p56
      $region14: #{encoder_classifier_2d_forward.2} parent=11 // pred_check_branch
        %120 = sbr.rel (%p118) target = $region16
      $region15: #{encoder_classifier_2d_forward.2} parent=11 // pred_region
        _
      $region16: #{encoder_classifier_2d_forward.2} parent=11 // pred_fallthru
        _
      // Predicated region
      $region17: #{encoder_classifier_2d_forward.2} parent=11 // pred_check
        %p121 = pneg %p77
      $region18: #{encoder_classifier_2d_forward.2} parent=11 // pred_check_branch
        %123 = sbr.rel (%p121) target = $region20
      $region19: #{encoder_classifier_2d_forward.2} parent=11 // pred_region
        _
      $region20: #{encoder_classifier_2d_forward.2} parent=11 // pred_fallthru
        _
    $region12: #{encoder_classifier_2d_forward.2} parent=5 // pred_fallthru
      _
    %p124 = scmp.lt.s32.totalorder %s9, 2
    // Predicated region
    $region21: #{encoder_classifier_2d_forward.2} parent=5 // pred_check
      %p125 = pneg %p124
    $region22: #{encoder_classifier_2d_forward.2} parent=5 // pred_check_branch
      %127 = sbr.rel (%p125) target = $region24
    $region23: #{encoder_classifier_2d_forward.2} parent=5 // pred_region
      // Predicated region
      $region25: #{encoder_classifier_2d_forward.2} parent=23 // pred_check
        %p128 = pneg %p29
      $region26: #{encoder_classifier_2d_forward.2} parent=23 // pred_check_branch
        %130 = sbr.rel (%p128) target = $region28
      $region27: #{encoder_classifier_2d_forward.2} parent=23 // pred_region
        %s131 = smul.u32 8, %s9
        %p132 = scmp.lt.s32.totalorder %s131, 15
        %s133 = scalar_select %p132, %s131, 15
        %s134 = smul.addr %s133, 4
        %s135 = scalar_lea.vmem %s0, %s134
        %s136 = smul.u32 8, %s9
      $region28: #{encoder_classifier_2d_forward.2} parent=23 // pred_fallthru
        _
    $region24: #{encoder_classifier_2d_forward.2} parent=5 // pred_fallthru
      _
    %p137 = scmp.le.s32.totalorder 1, %s9
    %p138 = scmp.lt.s32.totalorder %s9, 3
    %p139 = pnand %p137, %p138
    %p140 = pneg %p139
    // Predicated region
    $region29: #{encoder_classifier_2d_forward.2} parent=5 // pred_check
      _
    $region30: #{encoder_classifier_2d_forward.2} parent=5 // pred_check_branch
      %142 = sbr.rel (%p139) target = $region32
    $region31: #{encoder_classifier_2d_forward.2} parent=5 // pred_region
      %s143 = ssub.s32 %s9, 1
      %s144 = smul.u32 8, %s14
      %p145 = scmp.lt.s32.totalorder %s144, 15
      %s146 = scalar_select %p145, %s144, 15
      %s147 = smul.addr %s146, 4
      %s148 = scalar_lea.vmem %s0, %s147
      %p149 = pneg %p35
      %p150 = pneg %p32
      %p151 = pneg %p56
      %p152 = pneg %p53
      %p153 = pneg %p77
      %p154 = pneg %p74
      %p155 = pneg %p103
      %p156 = pneg %p100
      %s157 = smul.u32 8, %s14
      %p158 = scmp.lt.s32.totalorder %s157, 15
      %s159 = scalar_select %p158, %s157, 15
      %s160 = smul.addr %s159, 4
      %s161 = scalar_lea.vmem %s3, %s160
      %s162 = smul.u32 8, %s14
      %p163 = scmp.lt.s32.totalorder %s162, 15
      %s164 = scalar_select %p163, %s162, 15
      %s165 = smul.addr %s164, 4
      %s166 = scalar_lea.vmem %s0, %s165
      %s167 = smul.u32 8, %s14
      %s168 = smul.u32 8, %s14
      %p169 = scmp.lt.s32.totalorder %s168, 15
      %s170 = scalar_select %p169, %s168, 15
      %s171 = smul.addr %s170, 4
      %s172 = scalar_lea.vmem %s3, %s171
      %s173 = smul.u32 8, %s14
      %v175 = vld [vmem:[%s166] sm:$0xf]
      %v176 = vld [vmem:[%s166 + $0x4] sm:$0xf]
      %v177 = vld [vmem:[%s166 + $0x8] sm:$0xf]
      %v178 = vld [vmem:[%s166 + $0xc] sm:$0xf]
      %v179 = vld [vmem:[%s166 + $0x10] sm:$0xf]
      %v180 = vld [vmem:[%s166 + $0x14] sm:$0xf]
      %v181 = vld [vmem:[%s166 + $0x18] sm:$0xf]
      %v182 = vld [vmem:[%s166 + $0x1c] sm:$0xf]
      %v183 = vld [vmem:[%s1] sm:$0xf]
      %v184 = vld [vmem:[%s1 + $0x4] sm:$0xf]
      %v185 = vld [vmem:[%s1 + $0x8] sm:$0xf]
      %v186 = vld [vmem:[%s1 + $0xc] sm:$0xf]
      %v187 = vld [vmem:[%s1 + $0x10] sm:$0x3]
      %v188 = vld [vmem:[%s2] sm:$0x1]
      %v190 = vperm.slane %v188, 0
      %v200 = vunpack.c.l.b16 %v175
      %v201 = vunpack.c.l.b16 %v176
      %v202 = vunpack.c.l.b16 %v177
      %v203 = vunpack.c.l.b16 %v178
      %v204 = vunpack.c.l.b16 %v179
      %v205 = vunpack.c.l.b16 %v180
      %v206 = vunpack.c.l.b16 %v181
      %v207 = vunpack.c.l.b16 %v182
      %v208 = vpack.c.b16 %v201, %v200
      %v209 = vpack.c.b16 %v203, %v202
      %v210 = vpack.c.b16 %v205, %v204
      %v211 = vpack.c.b16 %v207, %v206
      %v217 = vunpack.c.l.b16 %v183
      %v218 = vunpack.c.l.b16 %v184
      %v219 = vunpack.c.l.b16 %v185
      %v220 = vunpack.c.l.b16 %v186
      %v221 = vunpack.c.l.b16 %v187
      %v222 = vpack.c.b16 %v218, %v217
      %v223 = vpack.c.b16 %v220, %v219
      %v224 = vpack.c.b16 %v221, %v221
      %vm227 = vcmask 293888
      %v229 = vsel %vm227, %v208, 0
      %v232 = vsel %vm227, %v209, 0
      %v235 = vsel %vm227, %v210, 0
      %v238 = vsel %vm227, %v211, 0
      %vm240 = vcmask 1041408
      %v242 = vsel %vm240, %v224, 0
      %244 = vmatpush.bf16.msra.mxu0 0
      %245 = vmatpush.bf16.msra.mxu0 0
      %246 = vmatpush.bf16.msra.mxu0 0
      %247 = vmatpush.bf16.msra.mxu0 0
      %248 = vmatpush.bf16.msra.mxu0 0
      %249 = vmatpush.bf16.msra.mxu0 %v242
      %250 = vmatpush.bf16.msra.mxu0 %v223
      %251 = vmatpush.bf16.msra.mxu0 %v222
      %252 = vmatmul.bf16.gmra.mxu0 %v229
      %v253 = vpop.f32.mrf.mxu0
      %v254 = vadd.f32 %v190, %v253
      %v255 = vpop.f32.mrf.mxu0
      %v256 = vadd.f32 %v190, %v255
      %257 = vmatmul.bf16.gmra.mxu0 %v232
      %v258 = vpop.f32.mrf.mxu0
      %v259 = vadd.f32 %v190, %v258
      %v260 = vpop.f32.mrf.mxu0
      %v261 = vadd.f32 %v190, %v260
      %262 = vmatmul.bf16.gmra.mxu0 %v235
      %v263 = vpop.f32.mrf.mxu0
      %v264 = vadd.f32 %v190, %v263
      %v265 = vpop.f32.mrf.mxu0
      %v266 = vadd.f32 %v190, %v265
      %267 = vmatmul.bf16.gmra.mxu0 %v238
      %v268 = vpop.f32.mrf.mxu0
      %v269 = vadd.f32 %v190, %v268
      %v270 = vpop.f32.mrf.mxu0
      %v271 = vadd.f32 %v190, %v270
      %272 = vdwg.mxu0
      %v273 = vmax.f32 %v254, 0.0
      %v274 = vmax.f32 %v256, 0.0
      %v275 = vmax.f32 %v259, 0.0
      %v276 = vmax.f32 %v261, 0.0
      %v277 = vmax.f32 %v264, 0.0
      %v278 = vmax.f32 %v266, 0.0
      %v279 = vmax.f32 %v269, 0.0
      %v280 = vmax.f32 %v271, 0.0
      %v281 = vpack.c.bf16 %v273, %v273
      %v282 = vpack.c.bf16 %v274, %v274
      %v283 = vpack.c.bf16 %v275, %v275
      %v284 = vpack.c.bf16 %v276, %v276
      %v285 = vpack.c.bf16 %v277, %v277
      %v286 = vpack.c.bf16 %v278, %v278
      %v287 = vpack.c.bf16 %v279, %v279
      %v288 = vpack.c.bf16 %v280, %v280
      %vm289 = vcmask 125952
      %290 = vst.msk [vmem:[%s172] sm:$0xf] %vm289, %v281
      %291 = vst.msk [vmem:[%s172 + $0x4] sm:$0xf] %vm289, %v282
      %292 = vst.msk [vmem:[%s172 + $0x8] sm:$0xf] %vm289, %v283
      %293 = vst.msk [vmem:[%s172 + $0xc] sm:$0xf] %vm289, %v284
      %294 = vst.msk [vmem:[%s172 + $0x10] sm:$0xf] %vm289, %v285
      %295 = vst.msk [vmem:[%s172 + $0x14] sm:$0xf] %vm289, %v286
      %296 = vst.msk [vmem:[%s172 + $0x18] sm:$0xf] %vm289, %v287
      %297 = vst.msk [vmem:[%s172 + $0x1c] sm:$0xf] %vm289, %v288
      %s298 = smul.u32 8, %s14
      %p299 = scmp.lt.s32.totalorder %s298, 15
      %s300 = scalar_select %p299, %s298, 15
      %s301 = smul.addr %s300, 4
      %s302 = scalar_lea.vmem %s3, %s301
      // Predicated region
      $region33: #{encoder_classifier_2d_forward.2} parent=31 // pred_check
        %p303 = pneg %p100
      $region34: #{encoder_classifier_2d_forward.2} parent=31 // pred_check_branch
        %305 = sbr.rel (%p303) target = $region36
      $region35: #{encoder_classifier_2d_forward.2} parent=31 // pred_region
        %s306 = smul.u32 8, %s14
      $region36: #{encoder_classifier_2d_forward.2} parent=31 // pred_fallthru
        _
    $region32: #{encoder_classifier_2d_forward.2} parent=5 // pred_fallthru
      _
    %p307 = scmp.le.s32.totalorder 2, %s9
    // Predicated region
    $region37: #{encoder_classifier_2d_forward.2} parent=5 // pred_check
      %p308 = pneg %p307
    $region38: #{encoder_classifier_2d_forward.2} parent=5 // pred_check_branch
      %310 = sbr.rel (%p308) target = $region40
    $region39: #{encoder_classifier_2d_forward.2} parent=5 // pred_region
      %s311 = ssub.s32 %s9, 2
      // Predicated region
      $region41: #{encoder_classifier_2d_forward.2} parent=39 // pred_check
        %p312 = pneg %p106
      $region42: #{encoder_classifier_2d_forward.2} parent=39 // pred_check_branch
        %314 = sbr.rel (%p312) target = $region44
      $region43: #{encoder_classifier_2d_forward.2} parent=39 // pred_region
        %s315 = smul.u32 8, %s15
        %p316 = scmp.lt.s32.totalorder %s315, 15
        %s317 = scalar_select %p316, %s315, 15
        %s318 = smul.addr %s317, 4
        %s319 = scalar_lea.vmem %s3, %s318
      $region44: #{encoder_classifier_2d_forward.2} parent=39 // pred_fallthru
        _
    $region40: #{encoder_classifier_2d_forward.2} parent=5 // pred_fallthru
      _
  $region6: #{encoder_classifier_2d_forward.2} parent=0 // loop_footer
    %s13 = sadd.s32 1, %s9
  $region7: #{encoder_classifier_2d_forward.2} parent=0 // loop_footer_branch
    %8 = sbr.rel target = $region3
  $region8: #{encoder_classifier_2d_forward.2} parent=0 // loop_exit
    _

// kernel: encoder_classifier_2d_forward.3
$region0: #{encoder_classifier_2d_forward.3}
  #allocation0 [shape = 'u32[]', space=smem, size = 0x4, offset = 0x4, fixed_abs, tag = 'smem constant byte address 0x4 - core index']
  #allocation1 [shape = 'u32[72,128]{1,0:T(1,128)}', space=vmem, size = 0x9000, scoped, tag = 'internal scratch']
  %s0 = inlined_call_operand.vmem [shape: bf16[2,16,144], index: 0, kind: input, shape index: {}]
  %s1 = inlined_call_operand.vmem [shape: bf16[144,32], index: 1, kind: input, shape index: {}]
  %s2 = inlined_call_operand.vmem [shape: f32[1,32], index: 2, kind: input, shape index: {}]
  %s3 = inlined_call_operand.vmem [shape: bf16[32,32], index: 3, kind: input, shape index: {}]
  %s4 = inlined_call_operand.vmem [shape: f32[1,32], index: 4, kind: input, shape index: {}]
  %s5 = inlined_call_operand.vmem [shape: bf16[32,16], index: 5, kind: input, shape index: {}]
  %s6 = inlined_call_operand.vmem [shape: f32[1,16], index: 6, kind: input, shape index: {}]
  %s7 = inlined_call_operand.vmem [shape: bf16[16,128], index: 7, kind: input, shape index: {}]
  %s8 = inlined_call_operand.vmem [shape: f32[1,128], index: 8, kind: input, shape index: {}]
  %s9 = inlined_call_operand.hbm [shape: f32[2,1,128], index: 9, kind: output, shape index: {}]
  %s10 = sld [smem:[#allocation0]]
  $region69: #{encoder_classifier_2d_forward.3} parent=0
    _
  %s12 = ssub.s32 1, %s10
  %s13 = scalar_select 0, %s12, %s10
  $region1: #{encoder_classifier_2d_forward.3} parent=0
    #allocation2 [shape = 'u8[1024]{0}', space=vmem, size = 0x400, scoped, tag = 'output window, operand 0']
    #allocation3 [shape = 's32[2]{0}', space=sflag, size = 0x8, scoped, tag = 'scoped memory for encoder_classifier_2d_forward.3']
    %14 = vsyncpa [#allocation3], 0
    %s15 = scalar_lea.sflag [#allocation3], 1
    %16 = vsyncpa %s15, 0
    loop: start=0, step=1, limit=4
    $region2: #{encoder_classifier_2d_forward.3} parent=1 // loop_pre_header
      _
    $region3: #{encoder_classifier_2d_forward.3} parent=1 // loop_header
      %s18 = sphi 0, %s22
      %p19 = scmp.ge.s32.totalorder %s18, 4
      %s28 = sphi 0, %s30
      %s31 = sphi 0, %s28
      %s32 = sphi 0, %s31
      %s48 = sphi 0, %s32
      %s52 = sphi 0, %s52
      %s54 = sphi 0, %s52
      %s55 = sphi 0, %s54
      %s69 = sphi 0, %s55
      %s73 = sphi 0, %s73
      %s75 = sphi 0, %s73
      %s76 = sphi 0, %s75
      %s90 = sphi 0, %s76
      %s94 = sphi 0, %s94
      %s96 = sphi 0, %s94
      %s97 = sphi 0, %s96
      %s111 = sphi 0, %s97
      %s115 = sphi 0, %s115
      %s117 = sphi 0, %s115
      %s118 = sphi 0, %s117
      %s132 = sphi 0, %s118
      %s136 = sphi 0, %s136
      %s138 = sphi 0, %s136
      %s139 = sphi 0, %s138
      %s153 = sphi 0, %s139
      %s157 = sphi 0, %s157
      %s159 = sphi 0, %s157
      %s160 = sphi 0, %s159
      %s174 = sphi 0, %s160
      %s178 = sphi 0, %s178
      %s180 = sphi 0, %s178
      %s181 = sphi 0, %s180
      %s195 = sphi 0, %s181
      %s199 = sphi 0, %s199
      %s201 = sphi 0, %s199
      %s202 = sphi 0, %s201
      %s216 = sphi 0, %s202
      %s222 = sphi 0, %s224
      %s225 = sphi 0, %s222
      %s226 = sphi 0, %s225
      %s242 = sphi 0, %s226
    $region4: #{encoder_classifier_2d_forward.3} parent=1 // loop_header_branch
      %21 = sbr.rel (%p19) target = $region8
    $region5: #{encoder_classifier_2d_forward.3} parent=1 // loop_body
      %s23 = ssub.s32 %s18, 1
      %s24 = ssub.s32 %s18, 2
      %s25 = sadd.s32 %s18, 1
      %s26 = ssub.s32 %s18, %s25
      %p27 = scmp.eq.s32.totalorder %s26, 0
      %s29 = sadd.s32 %s28, 1
      %s30 = scalar_select %p27, %s28, %s29
      %p33 = pneg %p27
      %p34 = scmp.eq.s32.totalorder %s18, 1
      %p35 = por %p33, %p34
      %p36 = scmp.ne.s32.totalorder %s28, %s31
      %p37 = scmp.eq.s32.totalorder %s18, 0
      %p38 = por %p36, %p37
      %p39 = scmp.ne.s32.totalorder %s28, %s31
      %p40 = scmp.eq.s32.totalorder %s23, 1
      %p41 = por %p39, %p40
      %p42 = scmp.ne.s32.totalorder %s31, %s32
      %p43 = scmp.eq.s32.totalorder %s23, 0
      %p44 = por %p42, %p43
      %p45 = scmp.ne.s32.totalorder %s31, %s32
      %p46 = scmp.eq.s32.totalorder %s24, 1
      %p47 = por %p45, %p46
      %p49 = scmp.ne.s32.totalorder %s32, %s48
      %p50 = scmp.eq.s32.totalorder %s24, 0
      %p51 = por %p49, %p50
      %s53 = sadd.s32 %s52, 1
      %p56 = scmp.eq.s32.totalorder %s18, 1
      %p57 = scmp.ne.s32.totalorder %s52, %s54
      %p58 = scmp.eq.s32.totalorder %s18, 0
      %p59 = por %p57, %p58
      %p60 = scmp.ne.s32.totalorder %s52, %s54
      %p61 = scmp.eq.s32.totalorder %s23, 1
      %p62 = por %p60, %p61
      %p63 = scmp.ne.s32.totalorder %s54, %s55
      %p64 = scmp.eq.s32.totalorder %s23, 0
      %p65 = por %p63, %p64
      %p66 = scmp.ne.s32.totalorder %s54, %s55
      %p67 = scmp.eq.s32.totalorder %s24, 1
      %p68 = por %p66, %p67
      %p70 = scmp.ne.s32.totalorder %s55, %s69
      %p71 = scmp.eq.s32.totalorder %s24, 0
      %p72 = por %p70, %p71
      %s74 = sadd.s32 %s73, 1
      %p77 = scmp.eq.s32.totalorder %s18, 1
      %p78 = scmp.ne.s32.totalorder %s73, %s75
      %p79 = scmp.eq.s32.totalorder %s18, 0
      %p80 = por %p78, %p79
      %p81 = scmp.ne.s32.totalorder %s73, %s75
      %p82 = scmp.eq.s32.totalorder %s23, 1
      %p83 = por %p81, %p82
      %p84 = scmp.ne.s32.totalorder %s75, %s76
      %p85 = scmp.eq.s32.totalorder %s23, 0
      %p86 = por %p84, %p85
      %p87 = scmp.ne.s32.totalorder %s75, %s76
      %p88 = scmp.eq.s32.totalorder %s24, 1
      %p89 = por %p87, %p88
      %p91 = scmp.ne.s32.totalorder %s76, %s90
      %p92 = scmp.eq.s32.totalorder %s24, 0
      %p93 = por %p91, %p92
      %s95 = sadd.s32 %s94, 1
      %p98 = scmp.eq.s32.totalorder %s18, 1
      %p99 = scmp.ne.s32.totalorder %s94, %s96
      %p100 = scmp.eq.s32.totalorder %s18, 0
      %p101 = por %p99, %p100
      %p102 = scmp.ne.s32.totalorder %s94, %s96
      %p103 = scmp.eq.s32.totalorder %s23, 1
      %p104 = por %p102, %p103
      %p105 = scmp.ne.s32.totalorder %s96, %s97
      %p106 = scmp.eq.s32.totalorder %s23, 0
      %p107 = por %p105, %p106
      %p108 = scmp.ne.s32.totalorder %s96, %s97
      %p109 = scmp.eq.s32.totalorder %s24, 1
      %p110 = por %p108, %p109
      %p112 = scmp.ne.s32.totalorder %s97, %s111
      %p113 = scmp.eq.s32.totalorder %s24, 0
      %p114 = por %p112, %p113
      %s116 = sadd.s32 %s115, 1
      %p119 = scmp.eq.s32.totalorder %s18, 1
      %p120 = scmp.ne.s32.totalorder %s115, %s117
      %p121 = scmp.eq.s32.totalorder %s18, 0
      %p122 = por %p120, %p121
      %p123 = scmp.ne.s32.totalorder %s115, %s117
      %p124 = scmp.eq.s32.totalorder %s23, 1
      %p125 = por %p123, %p124
      %p126 = scmp.ne.s32.totalorder %s117, %s118
      %p127 = scmp.eq.s32.totalorder %s23, 0
      %p128 = por %p126, %p127
      %p129 = scmp.ne.s32.totalorder %s117, %s118
      %p130 = scmp.eq.s32.totalorder %s24, 1
      %p131 = por %p129, %p130
      %p133 = scmp.ne.s32.totalorder %s118, %s132
      %p134 = scmp.eq.s32.totalorder %s24, 0
      %p135 = por %p133, %p134
      %s137 = sadd.s32 %s136, 1
      %p140 = scmp.eq.s32.totalorder %s18, 1
      %p141 = scmp.ne.s32.totalorder %s136, %s138
      %p142 = scmp.eq.s32.totalorder %s18, 0
      %p143 = por %p141, %p142
      %p144 = scmp.ne.s32.totalorder %s136, %s138
      %p145 = scmp.eq.s32.totalorder %s23, 1
      %p146 = por %p144, %p145
      %p147 = scmp.ne.s32.totalorder %s138, %s139
      %p148 = scmp.eq.s32.totalorder %s23, 0
      %p149 = por %p147, %p148
      %p150 = scmp.ne.s32.totalorder %s138, %s139
      %p151 = scmp.eq.s32.totalorder %s24, 1
      %p152 = por %p150, %p151
      %p154 = scmp.ne.s32.totalorder %s139, %s153
      %p155 = scmp.eq.s32.totalorder %s24, 0
      %p156 = por %p154, %p155
      %s158 = sadd.s32 %s157, 1
      %p161 = scmp.eq.s32.totalorder %s18, 1
      %p162 = scmp.ne.s32.totalorder %s157, %s159
      %p163 = scmp.eq.s32.totalorder %s18, 0
      %p164 = por %p162, %p163
      %p165 = scmp.ne.s32.totalorder %s157, %s159
      %p166 = scmp.eq.s32.totalorder %s23, 1
      %p167 = por %p165, %p166
      %p168 = scmp.ne.s32.totalorder %s159, %s160
      %p169 = scmp.eq.s32.totalorder %s23, 0
      %p170 = por %p168, %p169
      %p171 = scmp.ne.s32.totalorder %s159, %s160
      %p172 = scmp.eq.s32.totalorder %s24, 1
      %p173 = por %p171, %p172
      %p175 = scmp.ne.s32.totalorder %s160, %s174
      %p176 = scmp.eq.s32.totalorder %s24, 0
      %p177 = por %p175, %p176
      %s179 = sadd.s32 %s178, 1
      %p182 = scmp.eq.s32.totalorder %s18, 1
      %p183 = scmp.ne.s32.totalorder %s178, %s180
      %p184 = scmp.eq.s32.totalorder %s18, 0
      %p185 = por %p183, %p184
      %p186 = scmp.ne.s32.totalorder %s178, %s180
      %p187 = scmp.eq.s32.totalorder %s23, 1
      %p188 = por %p186, %p187
      %p189 = scmp.ne.s32.totalorder %s180, %s181
      %p190 = scmp.eq.s32.totalorder %s23, 0
      %p191 = por %p189, %p190
      %p192 = scmp.ne.s32.totalorder %s180, %s181
      %p193 = scmp.eq.s32.totalorder %s24, 1
      %p194 = por %p192, %p193
      %p196 = scmp.ne.s32.totalorder %s181, %s195
      %p197 = scmp.eq.s32.totalorder %s24, 0
      %p198 = por %p196, %p197
      %s200 = sadd.s32 %s199, 1
      %p203 = scmp.eq.s32.totalorder %s18, 1
      %p204 = scmp.ne.s32.totalorder %s199, %s201
      %p205 = scmp.eq.s32.totalorder %s18, 0
      %p206 = por %p204, %p205
      %p207 = scmp.ne.s32.totalorder %s199, %s201
      %p208 = scmp.eq.s32.totalorder %s23, 1
      %p209 = por %p207, %p208
      %p210 = scmp.ne.s32.totalorder %s201, %s202
      %p211 = scmp.eq.s32.totalorder %s23, 0
      %p212 = por %p210, %p211
      %p213 = scmp.ne.s32.totalorder %s201, %s202
      %p214 = scmp.eq.s32.totalorder %s24, 1
      %p215 = por %p213, %p214
      %p217 = scmp.ne.s32.totalorder %s202, %s216
      %p218 = scmp.eq.s32.totalorder %s24, 0
      %p219 = por %p217, %p218
      %s220 = ssub.s32 %s18, %s25
      %p221 = scmp.eq.s32.totalorder %s220, 0
      %s223 = sadd.s32 %s222, 1
      %s224 = scalar_select %p221, %s222, %s223
      %p227 = pneg %p221
      %p228 = scmp.eq.s32.totalorder %s18, 1
      %p229 = por %p227, %p228
      %p230 = scmp.ne.s32.totalorder %s222, %s225
      %p231 = scmp.eq.s32.totalorder %s18, 0
      %p232 = por %p230, %p231
      %p233 = scmp.ne.s32.totalorder %s222, %s225
      %p234 = scmp.eq.s32.totalorder %s23, 1
      %p235 = por %p233, %p234
      %p236 = scmp.ne.s32.totalorder %s225, %s226
      %p237 = scmp.eq.s32.totalorder %s23, 0
      %p238 = por %p236, %p237
      %p239 = scmp.ne.s32.totalorder %s225, %s226
      %p240 = scmp.eq.s32.totalorder %s24, 1
      %p241 = por %p239, %p240
      %p243 = scmp.ne.s32.totalorder %s226, %s242
      %p244 = scmp.eq.s32.totalorder %s24, 0
      %p245 = por %p243, %p244
      %p246 = scmp.le.s32.totalorder 1, %s18
      %p247 = scmp.lt.s32.totalorder %s18, 3
      %p248 = pnand %p246, %p247
      %p249 = pneg %p248
      // Predicated region
      $region9: #{encoder_classifier_2d_forward.3} parent=5 // pred_check
        _
      $region10: #{encoder_classifier_2d_forward.3} parent=5 // pred_check_branch
        %251 = sbr.rel (%p248) target = $region12
      $region11: #{encoder_classifier_2d_forward.3} parent=5 // pred_region
        %s252 = ssub.s32 %s18, 1
        // Predicated region
        $region13: #{encoder_classifier_2d_forward.3} parent=11 // pred_check
          %p253 = pneg %p65
        $region14: #{encoder_classifier_2d_forward.3} parent=11 // pred_check_branch
          %255 = sbr.rel (%p253) target = $region16
        $region15: #{encoder_classifier_2d_forward.3} parent=11 // pred_region
          _
        $region16: #{encoder_classifier_2d_forward.3} parent=11 // pred_fallthru
          _
        // Predicated region
        $region17: #{encoder_classifier_2d_forward.3} parent=11 // pred_check
          %p256 = pneg %p86
        $region18: #{encoder_classifier_2d_forward.3} parent=11 // pred_check_branch
          %258 = sbr.rel (%p256) target = $region20
        $region19: #{encoder_classifier_2d_forward.3} parent=11 // pred_region
          _
        $region20: #{encoder_classifier_2d_forward.3} parent=11 // pred_fallthru
          _
        // Predicated region
        $region21: #{encoder_classifier_2d_forward.3} parent=11 // pred_check
          %p259 = pneg %p107
        $region22: #{encoder_classifier_2d_forward.3} parent=11 // pred_check_branch
          %261 = sbr.rel (%p259) target = $region24
        $region23: #{encoder_classifier_2d_forward.3} parent=11 // pred_region
          _
        $region24: #{encoder_classifier_2d_forward.3} parent=11 // pred_fallthru
          _
        // Predicated region
        $region25: #{encoder_classifier_2d_forward.3} parent=11 // pred_check
          %p262 = pneg %p128
        $region26: #{encoder_classifier_2d_forward.3} parent=11 // pred_check_branch
          %264 = sbr.rel (%p262) target = $region28
        $region27: #{encoder_classifier_2d_forward.3} parent=11 // pred_region
          _
        $region28: #{encoder_classifier_2d_forward.3} parent=11 // pred_fallthru
          _
        // Predicated region
        $region29: #{encoder_classifier_2d_forward.3} parent=11 // pred_check
          %p265 = pneg %p149
        $region30: #{encoder_classifier_2d_forward.3} parent=11 // pred_check_branch
          %267 = sbr.rel (%p265) target = $region32
        $region31: #{encoder_classifier_2d_forward.3} parent=11 // pred_region
          _
        $region32: #{encoder_classifier_2d_forward.3} parent=11 // pred_fallthru
          _
        // Predicated region
        $region33: #{encoder_classifier_2d_forward.3} parent=11 // pred_check
          %p268 = pneg %p170
        $region34: #{encoder_classifier_2d_forward.3} parent=11 // pred_check_branch
          %270 = sbr.rel (%p268) target = $region36
        $region35: #{encoder_classifier_2d_forward.3} parent=11 // pred_region
          _
        $region36: #{encoder_classifier_2d_forward.3} parent=11 // pred_fallthru
          _
        // Predicated region
        $region37: #{encoder_classifier_2d_forward.3} parent=11 // pred_check
          %p271 = pneg %p191
        $region38: #{encoder_classifier_2d_forward.3} parent=11 // pred_check_branch
          %273 = sbr.rel (%p271) target = $region40
        $region39: #{encoder_classifier_2d_forward.3} parent=11 // pred_region
          _
        $region40: #{encoder_classifier_2d_forward.3} parent=11 // pred_fallthru
          _
        // Predicated region
        $region41: #{encoder_classifier_2d_forward.3} parent=11 // pred_check
          %p274 = pneg %p212
        $region42: #{encoder_classifier_2d_forward.3} parent=11 // pred_check_branch
          %276 = sbr.rel (%p274) target = $region44
        $region43: #{encoder_classifier_2d_forward.3} parent=11 // pred_region
          _
        $region44: #{encoder_classifier_2d_forward.3} parent=11 // pred_fallthru
          _
      $region12: #{encoder_classifier_2d_forward.3} parent=5 // pred_fallthru
        _
      %p277 = scmp.lt.s32.totalorder %s18, 2
      // Predicated region
      $region45: #{encoder_classifier_2d_forward.3} parent=5 // pred_check
        %p278 = pneg %p277
      $region46: #{encoder_classifier_2d_forward.3} parent=5 // pred_check_branch
        %280 = sbr.rel (%p278) target = $region48
      $region47: #{encoder_classifier_2d_forward.3} parent=5 // pred_region
        // Predicated region
        $region49: #{encoder_classifier_2d_forward.3} parent=47 // pred_check
          %p281 = pneg %p38
        $region50: #{encoder_classifier_2d_forward.3} parent=47 // pred_check_branch
          %283 = sbr.rel (%p281) target = $region52
        $region51: #{encoder_classifier_2d_forward.3} parent=47 // pred_region
          %p284 = scmp.lt.s32.totalorder %s18, 1
          %s285 = scalar_select %p284, %s18, 1
          %s286 = smul.addr %s285, 4
          %s287 = smul.addr %s286, 4
          %s288 = scalar_lea.vmem %s0, %s287
        $region52: #{encoder_classifier_2d_forward.3} parent=47 // pred_fallthru
          _
      $region48: #{encoder_classifier_2d_forward.3} parent=5 // pred_fallthru
        _
      %p289 = scmp.le.s32.totalorder 1, %s18
      %p290 = scmp.lt.s32.totalorder %s18, 3
      %p291 = pnand %p289, %p290
      %p292 = pneg %p291
      // Predicated region
      $region53: #{encoder_classifier_2d_forward.3} parent=5 // pred_check
        _
      $region54: #{encoder_classifier_2d_forward.3} parent=5 // pred_check_branch
        %294 = sbr.rel (%p291) target = $region56
      $region55: #{encoder_classifier_2d_forward.3} parent=5 // pred_region
        %s295 = ssub.s32 %s18, 1
        %p296 = scmp.lt.s32.totalorder %s23, 1
        %s297 = scalar_select %p296, %s23, 1
        %s298 = smul.addr %s297, 4
        %s299 = smul.addr %s298, 4
        %s300 = scalar_lea.vmem %s0, %s299
        %p301 = pneg %p44
        %p302 = pneg %p41
        %p303 = pneg %p65
        %p304 = pneg %p62
        %p305 = pneg %p86
        %p306 = pneg %p83
        %p307 = pneg %p107
        %p308 = pneg %p104
        %p309 = pneg %p128
        %p310 = pneg %p125
        %p311 = pneg %p149
        %p312 = pneg %p146
        %p313 = pneg %p170
        %p314 = pneg %p167
        %p315 = pneg %p191
        %p316 = pneg %p188
        %p317 = pneg %p212
        %p318 = pneg %p209
        %p319 = pneg %p238
        %p320 = pneg %p235
        %s321 = sand.u32 %s225, 1
        %s322 = scalar_lea.sflag [#allocation3], %s321
        %s323 = sand.u32 %s225, 1
        %s324 = scalar_lea.vmem [#allocation2], %s323
        %p325 = scmp.lt.s32.totalorder %s23, 1
        %s326 = scalar_select %p325, %s23, 1
        %s327 = smul.addr %s326, 4
        %s328 = smul.addr %s327, 4
        %s329 = scalar_lea.vmem %s0, %s328
        %v331 = vld [vmem:[%s329] sm:$0xff]
        %v332 = vld [vmem:[%s329 + $0x8] sm:$0xff]
        %v333 = vld [vmem:[%s1] sm:$0xf]
        %v334 = vld [vmem:[%s1 + $0x4] sm:$0xf]
        %v335 = vld [vmem:[%s1 + $0x8] sm:$0xf]
        %v336 = vld [vmem:[%s1 + $0xc] sm:$0xf]
        %v337 = vld [vmem:[%s1 + $0x10] sm:$0xf]
        %v338 = vld [vmem:[%s1 + $0x14] sm:$0xf]
        %v339 = vld [vmem:[%s1 + $0x18] sm:$0xf]
        %v340 = vld [vmem:[%s1 + $0x1c] sm:$0xf]
        %v341 = vld [vmem:[%s1 + $0x20] sm:$0xf]
        %v342 = vld [vmem:[%s1 + $0x24] sm:$0xf]
        %v343 = vld [vmem:[%s1 + $0x28] sm:$0xf]
        %v344 = vld [vmem:[%s1 + $0x2c] sm:$0xf]
        %v345 = vld [vmem:[%s1 + $0x30] sm:$0xf]
        %v346 = vld [vmem:[%s1 + $0x34] sm:$0xf]
        %v347 = vld [vmem:[%s1 + $0x38] sm:$0xf]
        %v348 = vld [vmem:[%s1 + $0x3c] sm:$0xf]
        %v349 = vld [vmem:[%s1 + $0x40] sm:$0xf]
        %v350 = vld [vmem:[%s1 + $0x44] sm:$0xf]
        %v351 = vld [vmem:[%s2] sm:$0x1]
        %v353 = vperm.slane %v351, 0
        %v357 = vunpack.c.l.b16 %v331
        %v358 = vunpack.c.h.b16 %v331
        %v359 = vunpack.c.l.b16 %v332
        %v360 = vunpack.c.h.b16 %v332
        %v361 = vpack.c.b16 %v359, %v357
        %v362 = vpack.c.b16 %v360, %v358
        %v382 = vunpack.c.l.b16 %v333
        %v383 = vunpack.c.l.b16 %v334
        %v384 = vunpack.c.l.b16 %v335
        %v385 = vunpack.c.l.b16 %v336
        %v386 = vunpack.c.l.b16 %v337
        %v387 = vunpack.c.l.b16 %v338
        %v388 = vunpack.c.l.b16 %v339
        %v389 = vunpack.c.l.b16 %v340
        %v390 = vunpack.c.l.b16 %v341
        %v391 = vunpack.c.l.b16 %v342
        %v392 = vunpack.c.l.b16 %v343
        %v393 = vunpack.c.l.b16 %v344
        %v394 = vunpack.c.l.b16 %v345
        %v395 = vunpack.c.l.b16 %v346
        %v396 = vunpack.c.l.b16 %v347
        %v397 = vunpack.c.l.b16 %v348
        %v398 = vunpack.c.l.b16 %v349
        %v399 = vunpack.c.l.b16 %v350
        %v400 = vpack.c.b16 %v383, %v382
        %v401 = vpack.c.b16 %v385, %v384
        %v402 = vpack.c.b16 %v387, %v386
        %v403 = vpack.c.b16 %v389, %v388
        %v404 = vpack.c.b16 %v391, %v390
        %v405 = vpack.c.b16 %v393, %v392
        %v406 = vpack.c.b16 %v395, %v394
        %v407 = vpack.c.b16 %v397, %v396
        %v408 = vpack.c.b16 %v399, %v398
        %vm418 = vcmask 130048
        %v420 = vsel %vm418, %v362, 0
        %422 = vmatpush.bf16.msra.mxu0 %v407
        %423 = vmatpush.bf16.msra.mxu0 %v406
        %424 = vmatpush.bf16.msra.mxu0 %v405
        %425 = vmatpush.bf16.msra.mxu0 %v404
        %426 = vmatpush.bf16.msra.mxu0 %v403
        %427 = vmatpush.bf16.msra.mxu0 %v402
        %428 = vmatpush.bf16.msra.mxu0 %v401
        %429 = vmatpush.bf16.msra.mxu0 %v400
        %430 = vmatmul.bf16.gmra.mxu0 %v361
        %v431 = vpop.f32.mrf.mxu0
        %v432 = vadd.f32 %v353, %v431
        %v433 = vpop.f32.mrf.mxu0
        %v434 = vadd.f32 %v353, %v433
        %435 = vdwg.mxu0
        %436 = vmatpush.bf16.msra.mxu0 0
        %437 = vmatpush.bf16.msra.mxu0 0
        %438 = vmatpush.bf16.msra.mxu0 0
        %439 = vmatpush.bf16.msra.mxu0 0
        %440 = vmatpush.bf16.msra.mxu0 0
        %441 = vmatpush.bf16.msra.mxu0 0
        %442 = vmatpush.bf16.msra.mxu0 0
        %443 = vmatpush.bf16.msra.mxu0 %v408
        %444 = vmatmul.bf16.gmra.mxu0 %v420
        %v445 = vpop.f32.mrf.mxu0
        %v446 = vadd.f32 %v432, %v445
        %v447 = vpop.f32.mrf.mxu0
        %v448 = vadd.f32 %v434, %v447
        %449 = vdwg.mxu0
        %v450 = vmax.f32 %v446, 0.0
        %v451 = vmax.f32 %v448, 0.0
        %vm452 = vcmask 261120
        %v453 = vsel %vm452, %v450, 0.0
        %v454 = vsel %vm452, %v451, 0.0
        %v455 = vadd.f32 %v453, %v454
        %v456 = vrot.slane %v455, 4
        %v457 = vadd.f32 %v455, %v456
        %v458 = vrot.slane %v457, 2
        %v459 = vadd.f32 %v457, %v458
        %v460 = vrot.slane %v459, 1
        %v461 = vadd.f32 %v459, %v460
        %v462 = vmul.f32 %v461, 0.0625
        %v463 = vpack.c.bf16 %v462, %v462
        %v464 = vld [vmem:[%s3] sm:$0xf]
        %v465 = vld [vmem:[%s3 + $0x4] sm:$0xf]
        %v466 = vld [vmem:[%s3 + $0x8] sm:$0xf]
        %v467 = vld [vmem:[%s3 + $0xc] sm:$0xf]
        %v468 = vld [vmem:[%s4] sm:$0x1]
        %v473 = vunpack.c.l.b16 %v464
        %v474 = vunpack.c.l.b16 %v465
        %v475 = vunpack.c.l.b16 %v466
        %v476 = vunpack.c.l.b16 %v467
        %v477 = vpack.c.b16 %v474, %v473
        %v478 = vpack.c.b16 %v476, %v475
        %v482 = vsel %vm452, %v463, 0
        %484 = vmatpush.bf16.msra.mxu0 0
        %485 = vmatpush.bf16.msra.mxu0 0
        %486 = vmatpush.bf16.msra.mxu0 0
        %487 = vmatpush.bf16.msra.mxu0 0
        %488 = vmatpush.bf16.msra.mxu0 0
        %489 = vmatpush.bf16.msra.mxu0 0
        %490 = vmatpush.bf16.msra.mxu0 %v478
        %491 = vmatpush.bf16.msra.mxu0 %v477
        %492 = vmatmul.bf16.gmra.mxu0 %v482
        %v493 = vpop.f32.mrf.mxu0
        %v494 = vadd.f32 %v468, %v493
        %v495 = vpop.f32.mrf.mxu0
        %496 = vdwg.mxu0
        %v497 = vmax.f32 %v494, 0.0
        %v498 = vpack.c.bf16 %v497, %v497
        %v499 = vld [vmem:[%s5] sm:$0xf]
        %v500 = vld [vmem:[%s5 + $0x4] sm:$0xf]
        %v501 = vld [vmem:[%s5 + $0x8] sm:$0xf]
        %v502 = vld [vmem:[%s5 + $0xc] sm:$0xf]
        %v503 = vld [vmem:[%s6] sm:$0x1]
        %v508 = vunpack.c.l.b16 %v499
        %v509 = vunpack.c.l.b16 %v500
        %v510 = vunpack.c.l.b16 %v501
        %v511 = vunpack.c.l.b16 %v502
        %v512 = vpack.c.b16 %v509, %v508
        %v513 = vpack.c.b16 %v511, %v510
        %v517 = vsel %vm452, %v498, 0
        %519 = vmatpush.bf16.msra.mxu0 0
        %520 = vmatpush.bf16.msra.mxu0 0
        %521 = vmatpush.bf16.msra.mxu0 0
        %522 = vmatpush.bf16.msra.mxu0 0
        %523 = vmatpush.bf16.msra.mxu0 0
        %524 = vmatpush.bf16.msra.mxu0 0
        %525 = vmatpush.bf16.msra.mxu0 %v513
        %526 = vmatpush.bf16.msra.mxu0 %v512
        %527 = vmatmul.bf16.gmra.mxu0 %v517
        %v528 = vpop.f32.mrf.mxu0
        %v529 = vadd.f32 %v503, %v528
        %v530 = vpop.f32.mrf.mxu0
        %531 = vdwg.mxu0
        %v532 = vmax.f32 %v529, 0.0
        %v533 = vpack.c.bf16 %v532, %v532
        %v534 = vld [vmem:[%s7] sm:$0xf]
        %v535 = vld [vmem:[%s7 + $0x4] sm:$0xf]
        %v536 = vld [vmem:[%s8] sm:$0x1]
        %v539 = vunpack.c.l.b16 %v534
        %v540 = vunpack.c.l.b16 %v535
        %v541 = vpack.c.b16 %v540, %v539
        %v544 = vsel %vm418, %v533, 0
        %546 = vmatpush.bf16.msra.mxu0 0
        %547 = vmatpush.bf16.msra.mxu0 0
        %548 = vmatpush.bf16.msra.mxu0 0
        %549 = vmatpush.bf16.msra.mxu0 0
        %550 = vmatpush.bf16.msra.mxu0 0
        %551 = vmatpush.bf16.msra.mxu0 0
        %552 = vmatpush.bf16.msra.mxu0 0
        %553 = vmatpush.bf16.msra.mxu0 %v541
        %554 = vmatmul.bf16.gmra.mxu0 %v544
        %v555 = vpop.f32.mrf.mxu0
        %v556 = vadd.f32 %v536, %v555
        %v557 = vpop.f32.mrf.mxu0
        %558 = vdwg.mxu0
        %559 = vst [vmem:[%s324] sm:$0x1] %v556
        %s560 = sand.u32 %s225, 1
        %s561 = scalar_lea.sflag [#allocation3], %s560
        %s562 = sand.u32 %s225, 1
        %s563 = scalar_lea.vmem [#allocation2], %s562
        // Predicated region
        $region57: #{encoder_classifier_2d_forward.3} parent=55 // pred_check
          %p564 = pneg %p235
        $region58: #{encoder_classifier_2d_forward.3} parent=55 // pred_check_branch
          %566 = sbr.rel (%p564) target = $region60
        $region59: #{encoder_classifier_2d_forward.3} parent=55 // pred_region
          %568 = vsyncadd %s561, 0
          %s569 = scalar_lea.hbm %s9, %s23
          %s571 = sshll.u32 %s563, 4
          %s572 = int_to_ptr.vmem [resolvable:$true] %s571
          %s573 = sshll.u32 %s569, 4
          %s574 = int_to_ptr.hbm [resolvable:$true] %s573
          %576 = dma.vmem_to_hbm [thread:$0]  %s572, 16, %s574, %s561
        $region60: #{encoder_classifier_2d_forward.3} parent=55 // pred_fallthru
          _
      $region56: #{encoder_classifier_2d_forward.3} parent=5 // pred_fallthru
        _
      %p577 = scmp.le.s32.totalorder 2, %s18
      // Predicated region
      $region61: #{encoder_classifier_2d_forward.3} parent=5 // pred_check
        %p578 = pneg %p577
      $region62: #{encoder_classifier_2d_forward.3} parent=5 // pred_check_branch
        %580 = sbr.rel (%p578) target = $region64
      $region63: #{encoder_classifier_2d_forward.3} parent=5 // pred_region
        %s581 = ssub.s32 %s18, 2
        // Predicated region
        $region65: #{encoder_classifier_2d_forward.3} parent=63 // pred_check
          %p582 = pneg %p241
        $region66: #{encoder_classifier_2d_forward.3} parent=63 // pred_check_branch
          %584 = sbr.rel (%p582) target = $region68
        $region67: #{encoder_classifier_2d_forward.3} parent=63 // pred_region
          %s585 = sand.u32 %s226, 1
          %s586 = scalar_lea.sflag [#allocation3], %s585
          %s587 = sand.u32 %s226, 1
          %s588 = scalar_lea.vmem [#allocation2], %s587
          %590 = dma.done %s586, 16
        $region68: #{encoder_classifier_2d_forward.3} parent=63 // pred_fallthru
          _
      $region64: #{encoder_classifier_2d_forward.3} parent=5 // pred_fallthru
        _
    $region6: #{encoder_classifier_2d_forward.3} parent=1 // loop_footer
      %s22 = sadd.s32 1, %s18
    $region7: #{encoder_classifier_2d_forward.3} parent=1 // loop_footer_branch
      %17 = sbr.rel target = $region3
    $region8: #{encoder_classifier_2d_forward.3} parent=1 // loop_exit
      _
    %591 = vsyncpa [#allocation3], 1
    %s592 = scalar_lea.sflag [#allocation3], 1
    %593 = vsyncpa %s592, 1

</llo_original>
